<compile_context>
chip_gen: v6e
topology: v6e:2x2x1
jax: 0.10.0
libtpu: 0.0.40
codegen_flags: <defaults>
</compile_context>

<pallas_src>
import jax
import jax.numpy as jnp
from jax.experimental import pallas as pl
from jax.experimental.pallas import tpu as pltpu

BN_EPS = 1e-5


# ----------------------------- kernel ---------------------------------------
def siamese_kernel(img_ref, txt_ref,
                   wi_ref, wt_ref, w1_ref, w2_ref,
                   v128_ref, v64_ref,
                   out_ref):
    """Fused forward pass for both branches.

    v128_ref : (9, 128) f32  rows = [bi, gi, bei, bt, gt, bet, b1, g1, be1]
    v64_ref  : (3, 64)  f32  rows = [b2, g2, be2]
    out_ref  : (B, 128) f32  lanes 0..63 = output1, lanes 64..127 = output2
    """
    B = img_ref.shape[0]
    v = v128_ref[...]
    v2 = v64_ref[...]

    def bn_relu(y, g, beta):
        # training-mode BatchNorm1d: batch mean, biased batch variance
        mean = jnp.mean(y, axis=0, keepdims=True)
        var = jnp.mean((y - mean) ** 2, axis=0, keepdims=True)
        y_hat = (y - mean) * jax.lax.rsqrt(var + BN_EPS)
        return jnp.maximum(y_hat * g + beta, 0.0)

    def lbr(x_bf16, w_ref, b, g, beta):
        y = jnp.dot(x_bf16, w_ref[...], preferred_element_type=jnp.float32) + b
        return bn_relu(y, g, beta)

    # Per-branch input transforms (bf16 matmul, f32 epilogue).
    h_img = lbr(img_ref[...], wi_ref, v[0:1], v[1:2], v[2:3])   # (B, 128) f32
    h_txt = lbr(txt_ref[...], wt_ref, v[3:4], v[4:5], v[5:6])   # (B, 128) f32

    # shared_net layer 1: one matmul over the stacked (2B, 128) activations,
    # BN stats computed per branch half.
    h = jnp.concatenate([h_img, h_txt], axis=0).astype(w1_ref.dtype)  # (2B,128) bf16
    y1 = jnp.dot(h, w1_ref[...], preferred_element_type=jnp.float32) + v[6:7]
    z1_img = bn_relu(y1[:B], v[7:8], v[8:9])
    z1_txt = bn_relu(y1[B:], v[7:8], v[8:9])

    # shared_net layer 2: same trick, (2B, 128) @ (128, 64).
    z1 = jnp.concatenate([z1_img, z1_txt], axis=0).astype(w2_ref.dtype)
    y2 = jnp.dot(z1, w2_ref[...], preferred_element_type=jnp.float32) + v2[0:1]
    o_img = bn_relu(y2[:B], v2[1:2], v2[2:3])                   # (B, 64) f32
    o_txt = bn_relu(y2[B:], v2[1:2], v2[2:3])                   # (B, 64) f32

    # Lane-dense (B, 128) output slab -> full-width unmasked stores.
    out_ref[...] = jnp.concatenate([o_img, o_txt], axis=-1)


# ----------------------------- wrapper ---------------------------------------
def _vmem_budget_bytes(arrays, out_bytes):
    total = sum(int(a.size) * a.dtype.itemsize for a in arrays) + out_bytes
    # 4x headroom for intermediates / padding; clamp so it is safe on v7x
    # (64 MiB physical VMEM) while comfortably above tiny test shapes.
    return int(min(max(4 * total, 16 * 1024 * 1024), 48 * 1024 * 1024))


@jax.jit
def siamese_forward(img, txt, wi, wt, w1, w2, v128, v64):
    """Returns (output1, output2), each (B, 64) f32."""
    B = img.shape[0]
    img_bf = img.astype(jnp.bfloat16)
    txt_bf = txt.astype(jnp.bfloat16)

    inputs = (img_bf, txt_bf, wi, wt, w1, w2, v128, v64)
    out_bytes = B * 128 * 4
    vmem = pl.BlockSpec(memory_space=pltpu.MemorySpace.VMEM)

    # TODO(synk): on v7x the two branches could instead be split across the
    # two TensorCores (grid=(2,) parallel); single-block + stacked shared
    # matmuls is the portable choice used here.
    out = pl.pallas_call(
        siamese_kernel,
        out_shape=jax.ShapeDtypeStruct((B, 128), jnp.float32),
        in_specs=[vmem] * len(inputs),
        out_specs=vmem,
        compiler_params=pltpu.CompilerParams(
            vmem_limit_bytes=_vmem_budget_bytes(inputs, out_bytes)),
    )(*inputs)
    return out[:, :64], out[:, 64:]


# ----------------------------- parameters ------------------------------------
def make_params(key, img_dim, text_dim, output_dim=128):
    """Deterministic synthetic parameters mirroring the PyTorch module shapes."""
    ks = jax.random.split(key, 8)

    def linear(kw, kb, d_in, d_out):
        lim = 1.0 / jnp.sqrt(jnp.float32(d_in))
        w = jax.random.uniform(kw, (d_in, d_out), jnp.float32, -lim, lim)  # [in, out]
        b = jax.random.uniform(kb, (1, d_out), jnp.float32, -lim, lim)
        return w, b

    def bn(d):
        return jnp.ones((1, d), jnp.float32), jnp.zeros((1, d), jnp.float32)

    wi, bi = linear(ks[0], ks[1], img_dim, output_dim)
    gi, bei = bn(output_dim)
    wt, bt = linear(ks[2], ks[3], text_dim, output_dim)
    gt, bet = bn(output_dim)
    w1, b1 = linear(ks[4], ks[5], output_dim, 128)
    g1, be1 = bn(128)
    w2, b2 = linear(ks[6], ks[7], 128, 64)
    g2, be2 = bn(64)

    return (wi, bi, gi, bei, wt, bt, gt, bet,
            w1, b1, g1, be1, w2, b2, g2, be2)


def pack_params(params):
    """bf16 weight matrices + packed f32 vector slabs for the kernel."""
    (wi, bi, gi, bei, wt, bt, gt, bet,
     w1, b1, g1, be1, w2, b2, g2, be2) = params
    v128 = jnp.concatenate([bi, gi, bei, bt, gt, bet, b1, g1, be1], axis=0)  # (9, 128)
    v64 = jnp.concatenate([b2, g2, be2], axis=0)                              # (3, 64)
    bf = lambda w: w.astype(jnp.bfloat16)
    return (bf(wi), bf(wt), bf(w1), bf(w2),
            v128.astype(jnp.float32), v64.astype(jnp.float32))


# ----------------------------- reference -------------------------------------
def ref_forward(img, txt, params):
    """Pure-JAX reference with the same bf16-matmul / f32-epilogue semantics."""
    (wi, bi, gi, bei, wt, bt, gt, bet,
     w1, b1, g1, be1, w2, b2, g2, be2) = params

    def lbr(x, w, b, g, be):
        y = jnp.dot(x.astype(jnp.bfloat16), w.astype(jnp.bfloat16),
                    preferred_element_type=jnp.float32) + b
        mean = jnp.mean(y, axis=0, keepdims=True)
        var = jnp.mean((y - mean) ** 2, axis=0, keepdims=True)
        return jnp.maximum((y - mean) * jax.lax.rsqrt(var + BN_EPS) * g + be, 0.0)

    def shared(h):
        h = lbr(h, w1, b1, g1, be1)
        return lbr(h, w2, b2, g2, be2)

    h_img = lbr(img, wi, bi, gi, bei)
    h_txt = lbr(txt, wt, bt, gt, bet)
    return shared(h_img), shared(h_txt)


# ----------------------------- main -------------------------------------------
if __name__ == "__main__":
    B = 8
    IMG_DIM = 256       # small stand-in for img_embedding_dim=2048
    TEXT_DIM = 128      # small stand-in for text_embedding_dim
    OUT_DIM = 128

    key = jax.random.PRNGKey(0)
    k_img, k_txt, k_par = jax.random.split(key, 3)

    img = jax.random.normal(k_img, (B, IMG_DIM), jnp.float32)
    txt = jax.random.normal(k_txt, (B, TEXT_DIM), jnp.float32)
    params = make_params(k_par, IMG_DIM, TEXT_DIM, OUT_DIM)
    packed = pack_params(params)

    out1, out2 = siamese_forward(img, txt, *packed)
    jax.block_until_ready((out1, out2))

    r1, r2 = ref_forward(img, txt, params)
    assert out1.shape == (B, 64) and out2.shape == (B, 64)
    assert jnp.allclose(out1, r1, atol=5e-3, rtol=5e-3)
    assert jnp.allclose(out2, r2, atol=5e-3, rtol=5e-3)

    print("KERNEL_OK")
</pallas_src>

<mosaic_0001>
module attributes {stable_mosaic.version = 11 : i64} {
  func.func @siamese_kernel(%arg0: memref<8x256xbf16, #tpu.memory_space<vmem>>, %arg1: memref<8x128xbf16, #tpu.memory_space<vmem>>, %arg2: memref<256x128xbf16, #tpu.memory_space<vmem>>, %arg3: memref<128x128xbf16, #tpu.memory_space<vmem>>, %arg4: memref<128x128xbf16, #tpu.memory_space<vmem>>, %arg5: memref<128x64xbf16, #tpu.memory_space<vmem>>, %arg6: memref<9x128xf32, #tpu.memory_space<vmem>>, %arg7: memref<3x64xf32, #tpu.memory_space<vmem>>, %arg8: memref<8x128xf32, #tpu.memory_space<vmem>>) attributes {dimension_semantics = [], scalar_prefetch = 0 : i64, scratch_operands = 0 : i64, tpu.core_type = #tpu.core_type<tc>} {
    %c0 = arith.constant 0 : index
    %c0_0 = arith.constant 0 : index
    %0 = vector.load %arg6[%c0, %c0_0] : memref<9x128xf32, #tpu.memory_space<vmem>>, vector<9x128xf32>
    %c0_1 = arith.constant 0 : index
    %c0_2 = arith.constant 0 : index
    %1 = vector.load %arg7[%c0_1, %c0_2] : memref<3x64xf32, #tpu.memory_space<vmem>>, vector<3x64xf32>
    %c0_3 = arith.constant 0 : index
    %c0_4 = arith.constant 0 : index
    %2 = vector.load %arg0[%c0_3, %c0_4] : memref<8x256xbf16, #tpu.memory_space<vmem>>, vector<8x256xbf16>
    %3 = vector.extract_strided_slice %0 {offsets = [0, 0], sizes = [1, 128], strides = [1, 1]} : vector<9x128xf32> to vector<1x128xf32>
    %4 = vector.extract_strided_slice %0 {offsets = [1, 0], sizes = [1, 128], strides = [1, 1]} : vector<9x128xf32> to vector<1x128xf32>
    %5 = vector.extract_strided_slice %0 {offsets = [2, 0], sizes = [1, 128], strides = [1, 1]} : vector<9x128xf32> to vector<1x128xf32>
    %c0_5 = arith.constant 0 : index
    %c0_6 = arith.constant 0 : index
    %6 = vector.load %arg2[%c0_5, %c0_6] : memref<256x128xbf16, #tpu.memory_space<vmem>>, vector<256x128xbf16>
    %cst = arith.constant dense<0.000000e+00> : vector<8x128xf32>
    %7 = tpu.matmul %2, %6, %cst {dimension_numbers = #tpu.dot_dimension_numbers<[1], [0], [0], [1], [0, 0, 1, 1], [], []>} : vector<8x256xbf16>, vector<256x128xbf16>, vector<8x128xf32> -> vector<8x128xf32>
    %8 = vector.broadcast %3 : vector<1x128xf32> to vector<8x128xf32>
    %9 = arith.addf %7, %8 : vector<8x128xf32>
    %cst_7 = arith.constant dense<0.000000e+00> : vector<128xf32>
    %10 = vector.multi_reduction <add>, %9, %cst_7 [0] : vector<8x128xf32> to vector<128xf32>
    %11 = vector.shape_cast %10 : vector<128xf32> to vector<1x128xf32>
    %cst_8 = arith.constant 8.000000e+00 : f32
    %12 = vector.broadcast %cst_8 : f32 to vector<1x128xf32>
    %13 = arith.divf %11, %12 : vector<1x128xf32>
    %14 = vector.broadcast %13 : vector<1x128xf32> to vector<8x128xf32>
    %15 = arith.subf %9, %14 : vector<8x128xf32>
    %16 = arith.mulf %15, %15 : vector<8x128xf32>
    %cst_9 = arith.constant dense<0.000000e+00> : vector<128xf32>
    %17 = vector.multi_reduction <add>, %16, %cst_9 [0] : vector<8x128xf32> to vector<128xf32>
    %18 = vector.shape_cast %17 : vector<128xf32> to vector<1x128xf32>
    %cst_10 = arith.constant 8.000000e+00 : f32
    %19 = vector.broadcast %cst_10 : f32 to vector<1x128xf32>
    %20 = arith.divf %18, %19 : vector<1x128xf32>
    %21 = vector.broadcast %13 : vector<1x128xf32> to vector<8x128xf32>
    %22 = arith.subf %9, %21 : vector<8x128xf32>
    %cst_11 = arith.constant 9.99999974E-6 : f32
    %23 = vector.broadcast %cst_11 : f32 to vector<1x128xf32>
    %24 = arith.addf %20, %23 : vector<1x128xf32>
    %25 = math.rsqrt %24 : vector<1x128xf32>
    %26 = vector.broadcast %25 : vector<1x128xf32> to vector<8x128xf32>
    %27 = arith.mulf %22, %26 : vector<8x128xf32>
    %28 = vector.broadcast %4 : vector<1x128xf32> to vector<8x128xf32>
    %29 = arith.mulf %27, %28 : vector<8x128xf32>
    %30 = vector.broadcast %5 : vector<1x128xf32> to vector<8x128xf32>
    %31 = arith.addf %29, %30 : vector<8x128xf32>
    %cst_12 = arith.constant 0.000000e+00 : f32
    %32 = vector.broadcast %cst_12 : f32 to vector<8x128xf32>
    %33 = arith.maximumf %31, %32 : vector<8x128xf32>
    %c0_13 = arith.constant 0 : index
    %c0_14 = arith.constant 0 : index
    %34 = vector.load %arg1[%c0_13, %c0_14] : memref<8x128xbf16, #tpu.memory_space<vmem>>, vector<8x128xbf16>
    %35 = vector.extract_strided_slice %0 {offsets = [3, 0], sizes = [1, 128], strides = [1, 1]} : vector<9x128xf32> to vector<1x128xf32>
    %36 = vector.extract_strided_slice %0 {offsets = [4, 0], sizes = [1, 128], strides = [1, 1]} : vector<9x128xf32> to vector<1x128xf32>
    %37 = vector.extract_strided_slice %0 {offsets = [5, 0], sizes = [1, 128], strides = [1, 1]} : vector<9x128xf32> to vector<1x128xf32>
    %c0_15 = arith.constant 0 : index
    %c0_16 = arith.constant 0 : index
    %38 = vector.load %arg3[%c0_15, %c0_16] : memref<128x128xbf16, #tpu.memory_space<vmem>>, vector<128x128xbf16>
    %cst_17 = arith.constant dense<0.000000e+00> : vector<8x128xf32>
    %39 = tpu.matmul %34, %38, %cst_17 {dimension_numbers = #tpu.dot_dimension_numbers<[1], [0], [0], [1], [0, 0, 1, 1], [], []>} : vector<8x128xbf16>, vector<128x128xbf16>, vector<8x128xf32> -> vector<8x128xf32>
    %40 = vector.broadcast %35 : vector<1x128xf32> to vector<8x128xf32>
    %41 = arith.addf %39, %40 : vector<8x128xf32>
    %cst_18 = arith.constant dense<0.000000e+00> : vector<128xf32>
    %42 = vector.multi_reduction <add>, %41, %cst_18 [0] : vector<8x128xf32> to vector<128xf32>
    %43 = vector.shape_cast %42 : vector<128xf32> to vector<1x128xf32>
    %cst_19 = arith.constant 8.000000e+00 : f32
    %44 = vector.broadcast %cst_19 : f32 to vector<1x128xf32>
    %45 = arith.divf %43, %44 : vector<1x128xf32>
    %46 = vector.broadcast %45 : vector<1x128xf32> to vector<8x128xf32>
    %47 = arith.subf %41, %46 : vector<8x128xf32>
    %48 = arith.mulf %47, %47 : vector<8x128xf32>
    %cst_20 = arith.constant dense<0.000000e+00> : vector<128xf32>
    %49 = vector.multi_reduction <add>, %48, %cst_20 [0] : vector<8x128xf32> to vector<128xf32>
    %50 = vector.shape_cast %49 : vector<128xf32> to vector<1x128xf32>
    %cst_21 = arith.constant 8.000000e+00 : f32
    %51 = vector.broadcast %cst_21 : f32 to vector<1x128xf32>
    %52 = arith.divf %50, %51 : vector<1x128xf32>
    %53 = vector.broadcast %45 : vector<1x128xf32> to vector<8x128xf32>
    %54 = arith.subf %41, %53 : vector<8x128xf32>
    %cst_22 = arith.constant 9.99999974E-6 : f32
    %55 = vector.broadcast %cst_22 : f32 to vector<1x128xf32>
    %56 = arith.addf %52, %55 : vector<1x128xf32>
    %57 = math.rsqrt %56 : vector<1x128xf32>
    %58 = vector.broadcast %57 : vector<1x128xf32> to vector<8x128xf32>
    %59 = arith.mulf %54, %58 : vector<8x128xf32>
    %60 = vector.broadcast %36 : vector<1x128xf32> to vector<8x128xf32>
    %61 = arith.mulf %59, %60 : vector<8x128xf32>
    %62 = vector.broadcast %37 : vector<1x128xf32> to vector<8x128xf32>
    %63 = arith.addf %61, %62 : vector<8x128xf32>
    %cst_23 = arith.constant 0.000000e+00 : f32
    %64 = vector.broadcast %cst_23 : f32 to vector<8x128xf32>
    %65 = arith.maximumf %63, %64 : vector<8x128xf32>
    %66 = tpu.concatenate %33, %65 in 0 : vector<8x128xf32>, vector<8x128xf32> -> vector<16x128xf32>
    %67 = arith.truncf %66 : vector<16x128xf32> to vector<16x128xbf16>
    %c0_24 = arith.constant 0 : index
    %c0_25 = arith.constant 0 : index
    %68 = vector.load %arg4[%c0_24, %c0_25] : memref<128x128xbf16, #tpu.memory_space<vmem>>, vector<128x128xbf16>
    %cst_26 = arith.constant dense<0.000000e+00> : vector<16x128xf32>
    %69 = tpu.matmul %67, %68, %cst_26 {dimension_numbers = #tpu.dot_dimension_numbers<[1], [0], [0], [1], [0, 0, 1, 1], [], []>} : vector<16x128xbf16>, vector<128x128xbf16>, vector<16x128xf32> -> vector<16x128xf32>
    %70 = vector.extract_strided_slice %0 {offsets = [6, 0], sizes = [1, 128], strides = [1, 1]} : vector<9x128xf32> to vector<1x128xf32>
    %71 = vector.broadcast %70 : vector<1x128xf32> to vector<16x128xf32>
    %72 = arith.addf %69, %71 : vector<16x128xf32>
    %73 = vector.extract_strided_slice %72 {offsets = [0, 0], sizes = [8, 128], strides = [1, 1]} : vector<16x128xf32> to vector<8x128xf32>
    %74 = vector.extract_strided_slice %0 {offsets = [7, 0], sizes = [1, 128], strides = [1, 1]} : vector<9x128xf32> to vector<1x128xf32>
    %75 = vector.extract_strided_slice %0 {offsets = [8, 0], sizes = [1, 128], strides = [1, 1]} : vector<9x128xf32> to vector<1x128xf32>
    %cst_27 = arith.constant dense<0.000000e+00> : vector<128xf32>
    %76 = vector.multi_reduction <add>, %73, %cst_27 [0] : vector<8x128xf32> to vector<128xf32>
    %77 = vector.shape_cast %76 : vector<128xf32> to vector<1x128xf32>
    %cst_28 = arith.constant 8.000000e+00 : f32
    %78 = vector.broadcast %cst_28 : f32 to vector<1x128xf32>
    %79 = arith.divf %77, %78 : vector<1x128xf32>
    %80 = vector.broadcast %79 : vector<1x128xf32> to vector<8x128xf32>
    %81 = arith.subf %73, %80 : vector<8x128xf32>
    %82 = arith.mulf %81, %81 : vector<8x128xf32>
    %cst_29 = arith.constant dense<0.000000e+00> : vector<128xf32>
    %83 = vector.multi_reduction <add>, %82, %cst_29 [0] : vector<8x128xf32> to vector<128xf32>
    %84 = vector.shape_cast %83 : vector<128xf32> to vector<1x128xf32>
    %cst_30 = arith.constant 8.000000e+00 : f32
    %85 = vector.broadcast %cst_30 : f32 to vector<1x128xf32>
    %86 = arith.divf %84, %85 : vector<1x128xf32>
    %87 = vector.broadcast %79 : vector<1x128xf32> to vector<8x128xf32>
    %88 = arith.subf %73, %87 : vector<8x128xf32>
    %cst_31 = arith.constant 9.99999974E-6 : f32
    %89 = vector.broadcast %cst_31 : f32 to vector<1x128xf32>
    %90 = arith.addf %86, %89 : vector<1x128xf32>
    %91 = math.rsqrt %90 : vector<1x128xf32>
    %92 = vector.broadcast %91 : vector<1x128xf32> to vector<8x128xf32>
    %93 = arith.mulf %88, %92 : vector<8x128xf32>
    %94 = vector.broadcast %74 : vector<1x128xf32> to vector<8x128xf32>
    %95 = arith.mulf %93, %94 : vector<8x128xf32>
    %96 = vector.broadcast %75 : vector<1x128xf32> to vector<8x128xf32>
    %97 = arith.addf %95, %96 : vector<8x128xf32>
    %cst_32 = arith.constant 0.000000e+00 : f32
    %98 = vector.broadcast %cst_32 : f32 to vector<8x128xf32>
    %99 = arith.maximumf %97, %98 : vector<8x128xf32>
    %100 = vector.extract_strided_slice %72 {offsets = [8, 0], sizes = [8, 128], strides = [1, 1]} : vector<16x128xf32> to vector<8x128xf32>
    %101 = vector.extract_strided_slice %0 {offsets = [7, 0], sizes = [1, 128], strides = [1, 1]} : vector<9x128xf32> to vector<1x128xf32>
    %102 = vector.extract_strided_slice %0 {offsets = [8, 0], sizes = [1, 128], strides = [1, 1]} : vector<9x128xf32> to vector<1x128xf32>
    %cst_33 = arith.constant dense<0.000000e+00> : vector<128xf32>
    %103 = vector.multi_reduction <add>, %100, %cst_33 [0] : vector<8x128xf32> to vector<128xf32>
    %104 = vector.shape_cast %103 : vector<128xf32> to vector<1x128xf32>
    %cst_34 = arith.constant 8.000000e+00 : f32
    %105 = vector.broadcast %cst_34 : f32 to vector<1x128xf32>
    %106 = arith.divf %104, %105 : vector<1x128xf32>
    %107 = vector.broadcast %106 : vector<1x128xf32> to vector<8x128xf32>
    %108 = arith.subf %100, %107 : vector<8x128xf32>
    %109 = arith.mulf %108, %108 : vector<8x128xf32>
    %cst_35 = arith.constant dense<0.000000e+00> : vector<128xf32>
    %110 = vector.multi_reduction <add>, %109, %cst_35 [0] : vector<8x128xf32> to vector<128xf32>
    %111 = vector.shape_cast %110 : vector<128xf32> to vector<1x128xf32>
    %cst_36 = arith.constant 8.000000e+00 : f32
    %112 = vector.broadcast %cst_36 : f32 to vector<1x128xf32>
    %113 = arith.divf %111, %112 : vector<1x128xf32>
    %114 = vector.broadcast %106 : vector<1x128xf32> to vector<8x128xf32>
    %115 = arith.subf %100, %114 : vector<8x128xf32>
    %cst_37 = arith.constant 9.99999974E-6 : f32
    %116 = vector.broadcast %cst_37 : f32 to vector<1x128xf32>
    %117 = arith.addf %113, %116 : vector<1x128xf32>
    %118 = math.rsqrt %117 : vector<1x128xf32>
    %119 = vector.broadcast %118 : vector<1x128xf32> to vector<8x128xf32>
    %120 = arith.mulf %115, %119 : vector<8x128xf32>
    %121 = vector.broadcast %101 : vector<1x128xf32> to vector<8x128xf32>
    %122 = arith.mulf %120, %121 : vector<8x128xf32>
    %123 = vector.broadcast %102 : vector<1x128xf32> to vector<8x128xf32>
    %124 = arith.addf %122, %123 : vector<8x128xf32>
    %cst_38 = arith.constant 0.000000e+00 : f32
    %125 = vector.broadcast %cst_38 : f32 to vector<8x128xf32>
    %126 = arith.maximumf %124, %125 : vector<8x128xf32>
    %127 = tpu.concatenate %99, %126 in 0 : vector<8x128xf32>, vector<8x128xf32> -> vector<16x128xf32>
    %128 = arith.truncf %127 : vector<16x128xf32> to vector<16x128xbf16>
    %c0_39 = arith.constant 0 : index
    %c0_40 = arith.constant 0 : index
    %129 = vector.load %arg5[%c0_39, %c0_40] : memref<128x64xbf16, #tpu.memory_space<vmem>>, vector<128x64xbf16>
    %cst_41 = arith.constant dense<0.000000e+00> : vector<16x64xf32>
    %130 = tpu.matmul %128, %129, %cst_41 {dimension_numbers = #tpu.dot_dimension_numbers<[1], [0], [0], [1], [0, 0, 1, 1], [], []>} : vector<16x128xbf16>, vector<128x64xbf16>, vector<16x64xf32> -> vector<16x64xf32>
    %131 = vector.extract_strided_slice %1 {offsets = [0, 0], sizes = [1, 64], strides = [1, 1]} : vector<3x64xf32> to vector<1x64xf32>
    %132 = vector.broadcast %131 : vector<1x64xf32> to vector<16x64xf32>
    %133 = arith.addf %130, %132 : vector<16x64xf32>
    %134 = vector.extract_strided_slice %133 {offsets = [0, 0], sizes = [8, 64], strides = [1, 1]} : vector<16x64xf32> to vector<8x64xf32>
    %135 = vector.extract_strided_slice %1 {offsets = [1, 0], sizes = [1, 64], strides = [1, 1]} : vector<3x64xf32> to vector<1x64xf32>
    %136 = vector.extract_strided_slice %1 {offsets = [2, 0], sizes = [1, 64], strides = [1, 1]} : vector<3x64xf32> to vector<1x64xf32>
    %cst_42 = arith.constant dense<0.000000e+00> : vector<64xf32>
    %137 = vector.multi_reduction <add>, %134, %cst_42 [0] : vector<8x64xf32> to vector<64xf32>
    %138 = vector.shape_cast %137 : vector<64xf32> to vector<1x64xf32>
    %cst_43 = arith.constant 8.000000e+00 : f32
    %139 = vector.broadcast %cst_43 : f32 to vector<1x64xf32>
    %140 = arith.divf %138, %139 : vector<1x64xf32>
    %141 = vector.broadcast %140 : vector<1x64xf32> to vector<8x64xf32>
    %142 = arith.subf %134, %141 : vector<8x64xf32>
    %143 = arith.mulf %142, %142 : vector<8x64xf32>
    %cst_44 = arith.constant dense<0.000000e+00> : vector<64xf32>
    %144 = vector.multi_reduction <add>, %143, %cst_44 [0] : vector<8x64xf32> to vector<64xf32>
    %145 = vector.shape_cast %144 : vector<64xf32> to vector<1x64xf32>
    %cst_45 = arith.constant 8.000000e+00 : f32
    %146 = vector.broadcast %cst_45 : f32 to vector<1x64xf32>
    %147 = arith.divf %145, %146 : vector<1x64xf32>
    %148 = vector.broadcast %140 : vector<1x64xf32> to vector<8x64xf32>
    %149 = arith.subf %134, %148 : vector<8x64xf32>
    %cst_46 = arith.constant 9.99999974E-6 : f32
    %150 = vector.broadcast %cst_46 : f32 to vector<1x64xf32>
    %151 = arith.addf %147, %150 : vector<1x64xf32>
    %152 = math.rsqrt %151 : vector<1x64xf32>
    %153 = vector.broadcast %152 : vector<1x64xf32> to vector<8x64xf32>
    %154 = arith.mulf %149, %153 : vector<8x64xf32>
    %155 = vector.broadcast %135 : vector<1x64xf32> to vector<8x64xf32>
    %156 = arith.mulf %154, %155 : vector<8x64xf32>
    %157 = vector.broadcast %136 : vector<1x64xf32> to vector<8x64xf32>
    %158 = arith.addf %156, %157 : vector<8x64xf32>
    %cst_47 = arith.constant 0.000000e+00 : f32
    %159 = vector.broadcast %cst_47 : f32 to vector<8x64xf32>
    %160 = arith.maximumf %158, %159 : vector<8x64xf32>
    %161 = vector.extract_strided_slice %133 {offsets = [8, 0], sizes = [8, 64], strides = [1, 1]} : vector<16x64xf32> to vector<8x64xf32>
    %162 = vector.extract_strided_slice %1 {offsets = [1, 0], sizes = [1, 64], strides = [1, 1]} : vector<3x64xf32> to vector<1x64xf32>
    %163 = vector.extract_strided_slice %1 {offsets = [2, 0], sizes = [1, 64], strides = [1, 1]} : vector<3x64xf32> to vector<1x64xf32>
    %cst_48 = arith.constant dense<0.000000e+00> : vector<64xf32>
    %164 = vector.multi_reduction <add>, %161, %cst_48 [0] : vector<8x64xf32> to vector<64xf32>
    %165 = vector.shape_cast %164 : vector<64xf32> to vector<1x64xf32>
    %cst_49 = arith.constant 8.000000e+00 : f32
    %166 = vector.broadcast %cst_49 : f32 to vector<1x64xf32>
    %167 = arith.divf %165, %166 : vector<1x64xf32>
    %168 = vector.broadcast %167 : vector<1x64xf32> to vector<8x64xf32>
    %169 = arith.subf %161, %168 : vector<8x64xf32>
    %170 = arith.mulf %169, %169 : vector<8x64xf32>
    %cst_50 = arith.constant dense<0.000000e+00> : vector<64xf32>
    %171 = vector.multi_reduction <add>, %170, %cst_50 [0] : vector<8x64xf32> to vector<64xf32>
    %172 = vector.shape_cast %171 : vector<64xf32> to vector<1x64xf32>
    %cst_51 = arith.constant 8.000000e+00 : f32
    %173 = vector.broadcast %cst_51 : f32 to vector<1x64xf32>
    %174 = arith.divf %172, %173 : vector<1x64xf32>
    %175 = vector.broadcast %167 : vector<1x64xf32> to vector<8x64xf32>
    %176 = arith.subf %161, %175 : vector<8x64xf32>
    %cst_52 = arith.constant 9.99999974E-6 : f32
    %177 = vector.broadcast %cst_52 : f32 to vector<1x64xf32>
    %178 = arith.addf %174, %177 : vector<1x64xf32>
    %179 = math.rsqrt %178 : vector<1x64xf32>
    %180 = vector.broadcast %179 : vector<1x64xf32> to vector<8x64xf32>
    %181 = arith.mulf %176, %180 : vector<8x64xf32>
    %182 = vector.broadcast %162 : vector<1x64xf32> to vector<8x64xf32>
    %183 = arith.mulf %181, %182 : vector<8x64xf32>
    %184 = vector.broadcast %163 : vector<1x64xf32> to vector<8x64xf32>
    %185 = arith.addf %183, %184 : vector<8x64xf32>
    %cst_53 = arith.constant 0.000000e+00 : f32
    %186 = vector.broadcast %cst_53 : f32 to vector<8x64xf32>
    %187 = arith.maximumf %185, %186 : vector<8x64xf32>
    %188 = tpu.concatenate %160, %187 in 1 : vector<8x64xf32>, vector<8x64xf32> -> vector<8x128xf32>
    %c0_54 = arith.constant 0 : index
    %c0_55 = arith.constant 0 : index
    %189 = vector.load %arg8[%c0_54, %c0_55] : memref<8x128xf32, #tpu.memory_space<vmem>>, vector<8x128xf32>
    tpu.vector_store %arg8[%c0_54, %c0_55], %188 {strides = array<i32>} : memref<8x128xf32, #tpu.memory_space<vmem>>, vector<8x128xf32>,
    return
  }
}

</mosaic_0001>

<llo_original>
// kernel: siamese_forward.1
$region0: #{siamese_forward.1}
  #allocation0 [shape = 'u32[]', space=smem, size = 0x4, offset = 0x4, fixed_abs, tag = 'smem constant byte address 0x4 - core index']
  #allocation1 [shape = 'u32[144,128]{1,0:T(1,128)}', space=vmem, size = 0x12000, scoped, tag = 'internal scratch']
  %s0 = inlined_call_operand.vmem [shape: bf16[8,256], index: 0, kind: input, shape index: {}]
  %s1 = inlined_call_operand.vmem [shape: bf16[8,128], index: 1, kind: input, shape index: {}]
  %s2 = inlined_call_operand.vmem [shape: bf16[256,128], index: 2, kind: input, shape index: {}]
  %s3 = inlined_call_operand.hbm [shape: bf16[128,128], index: 3, kind: input, shape index: {}]
  %s4 = inlined_call_operand.hbm [shape: bf16[128,128], index: 4, kind: input, shape index: {}]
  %s5 = inlined_call_operand.vmem [shape: bf16[128,64], index: 5, kind: input, shape index: {}]
  %s6 = inlined_call_operand.hbm [shape: f32[9,128], index: 6, kind: input, shape index: {}]
  %s7 = inlined_call_operand.vmem [shape: f32[3,64], index: 7, kind: input, shape index: {}]
  %s8 = inlined_call_operand.vmem [shape: f32[8,128], index: 8, kind: output, shape index: {}]
  %s9 = sld [smem:[#allocation0]]
  $region54: #{siamese_forward.1} parent=0
    _
  %s11 = ssub.s32 1, %s9
  %s12 = scalar_select 0, %s11, %s9
  $region1: #{siamese_forward.1} parent=0
    #allocation2 [shape = 'u8[32768]{0}', space=vmem, size = 0x8000, scoped, tag = 'input window, operand 3, single buffered']
    #allocation3 [shape = 's32[1]{0}', space=sflag, size = 0x4, scoped, tag = 'scoped memory for siamese_forward.1']
    #allocation4 [shape = 'u8[32768]{0}', space=vmem, size = 0x8000, scoped, tag = 'input window, operand 4, single buffered']
    #allocation5 [shape = 's32[1]{0}', space=sflag, size = 0x4, scoped, tag = 'scoped memory for siamese_forward.1']
    #allocation6 [shape = 'u8[8192]{0}', space=vmem, size = 0x2000, scoped, tag = 'input window, operand 6, single buffered']
    %13 = vsyncpa [#allocation3], 0
    %14 = vsyncpa [#allocation5], 0
    // Predicated region
    $region2: #{siamese_forward.1} parent=1 // pred_check
      _
    $region3: #{siamese_forward.1} parent=1 // pred_check_branch
      %16 = sbr.rel (0) target = $region5
    $region4: #{siamese_forward.1} parent=1 // pred_region
      _
    $region5: #{siamese_forward.1} parent=1 // pred_fallthru
      _
    // Predicated region
    $region6: #{siamese_forward.1} parent=1 // pred_check
      _
    $region7: #{siamese_forward.1} parent=1 // pred_check_branch
      %18 = sbr.rel (0) target = $region9
    $region8: #{siamese_forward.1} parent=1 // pred_region
      _
    $region9: #{siamese_forward.1} parent=1 // pred_fallthru
      _
    // Predicated region
    $region10: #{siamese_forward.1} parent=1 // pred_check
      _
    $region11: #{siamese_forward.1} parent=1 // pred_check_branch
      %20 = sbr.rel (0) target = $region13
    $region12: #{siamese_forward.1} parent=1 // pred_region
      _
    $region13: #{siamese_forward.1} parent=1 // pred_fallthru
      _
    // Predicated region
    $region14: #{siamese_forward.1} parent=1 // pred_check
      _
    $region15: #{siamese_forward.1} parent=1 // pred_check_branch
      %22 = sbr.rel (0) target = $region17
    $region16: #{siamese_forward.1} parent=1 // pred_region
      %s24 = ssub.s32 1024, 1024
      %25 = vsyncadd [#allocation3], %s24
      %s26 = sshll.u32 [#allocation2], 4
      %s27 = int_to_ptr.vmem [resolvable:$true] %s26
      %32 = dma.hbm_to_vmem [thread:$0]  %s3, 1024, %s27, [#allocation3], 64, 64, 4
    $region17: #{siamese_forward.1} parent=1 // pred_fallthru
      _
    // Predicated region
    $region18: #{siamese_forward.1} parent=1 // pred_check
      _
    $region19: #{siamese_forward.1} parent=1 // pred_check_branch
      %34 = sbr.rel (0) target = $region21
    $region20: #{siamese_forward.1} parent=1 // pred_region
      %s36 = ssub.s32 1024, 1024
      %37 = vsyncadd [#allocation5], %s36
      %s38 = sshll.u32 [#allocation4], 4
      %s39 = int_to_ptr.vmem [resolvable:$true] %s38
      %44 = dma.hbm_to_vmem [thread:$0]  %s4, 1024, %s39, [#allocation5], 64, 64, 4
    $region21: #{siamese_forward.1} parent=1 // pred_fallthru
      _
    // Predicated region
    $region22: #{siamese_forward.1} parent=1 // pred_check
      _
    $region23: #{siamese_forward.1} parent=1 // pred_check_branch
      %46 = sbr.rel (0) target = $region25
    $region24: #{siamese_forward.1} parent=1 // pred_region
      _
    $region25: #{siamese_forward.1} parent=1 // pred_fallthru
      _
    // Predicated region
    $region26: #{siamese_forward.1} parent=1 // pred_check
      _
    $region27: #{siamese_forward.1} parent=1 // pred_check_branch
      %48 = sbr.rel (0) target = $region29
    $region28: #{siamese_forward.1} parent=1 // pred_region
      %s50 = ssub.s32 256, 256
      %51 = vsyncadd [#allocation5], %s50
      %s52 = sshll.u32 [#allocation6], 4
      %s53 = int_to_ptr.vmem [resolvable:$true] %s52
      %58 = dma.hbm_to_vmem [thread:$0]  %s6, 256, %s53, [#allocation5], 128, 128, 8
    $region29: #{siamese_forward.1} parent=1 // pred_fallthru
      _
    // Predicated region
    $region30: #{siamese_forward.1} parent=1 // pred_check
      _
    $region31: #{siamese_forward.1} parent=1 // pred_check_branch
      %60 = sbr.rel (0) target = $region33
    $region32: #{siamese_forward.1} parent=1 // pred_region
      _
    $region33: #{siamese_forward.1} parent=1 // pred_fallthru
      _
    // Predicated region
    $region34: #{siamese_forward.1} parent=1 // pred_check
      _
    $region35: #{siamese_forward.1} parent=1 // pred_check_branch
      %62 = sbr.rel (0) target = $region37
    $region36: #{siamese_forward.1} parent=1 // pred_region
      %63 = dma.done [#allocation3], 1024
    $region37: #{siamese_forward.1} parent=1 // pred_fallthru
      _
    // Predicated region
    $region38: #{siamese_forward.1} parent=1 // pred_check
      _
    $region39: #{siamese_forward.1} parent=1 // pred_check_branch
      %65 = sbr.rel (0) target = $region41
    $region40: #{siamese_forward.1} parent=1 // pred_region
      %66 = dma.done [#allocation5], 1024
    $region41: #{siamese_forward.1} parent=1 // pred_fallthru
      _
    // Predicated region
    $region42: #{siamese_forward.1} parent=1 // pred_check
      _
    $region43: #{siamese_forward.1} parent=1 // pred_check_branch
      %68 = sbr.rel (0) target = $region45
    $region44: #{siamese_forward.1} parent=1 // pred_region
      %69 = dma.done [#allocation5], 256
    $region45: #{siamese_forward.1} parent=1 // pred_fallthru
      _
    %v71 = vld [vmem:[#allocation6] sm:$0xff]
    %v72 = vld [vmem:[#allocation6 + $0x8] sm:$0x1]
    %v73 = vld [vmem:[%s7] sm:$0x7]
    %v74 = vld [vmem:[%s0] sm:$0xff]
    %v75 = vld [vmem:[%s2] sm:$0xf]
    %v76 = vld [vmem:[%s2 + $0x4] sm:$0xf]
    %v77 = vld [vmem:[%s2 + $0x8] sm:$0xf]
    %v78 = vld [vmem:[%s2 + $0xc] sm:$0xf]
    %v79 = vld [vmem:[%s2 + $0x10] sm:$0xf]
    %v80 = vld [vmem:[%s2 + $0x14] sm:$0xf]
    %v81 = vld [vmem:[%s2 + $0x18] sm:$0xf]
    %v82 = vld [vmem:[%s2 + $0x1c] sm:$0xf]
    %v83 = vld [vmem:[%s2 + $0x20] sm:$0xf]
    %v84 = vld [vmem:[%s2 + $0x24] sm:$0xf]
    %v85 = vld [vmem:[%s2 + $0x28] sm:$0xf]
    %v86 = vld [vmem:[%s2 + $0x2c] sm:$0xf]
    %v87 = vld [vmem:[%s2 + $0x30] sm:$0xf]
    %v88 = vld [vmem:[%s2 + $0x34] sm:$0xf]
    %v89 = vld [vmem:[%s2 + $0x38] sm:$0xf]
    %v90 = vld [vmem:[%s2 + $0x3c] sm:$0xf]
    %v91 = vld [vmem:[%s2 + $0x40] sm:$0xf]
    %v92 = vld [vmem:[%s2 + $0x44] sm:$0xf]
    %v93 = vld [vmem:[%s2 + $0x48] sm:$0xf]
    %v94 = vld [vmem:[%s2 + $0x4c] sm:$0xf]
    %v95 = vld [vmem:[%s2 + $0x50] sm:$0xf]
    %v96 = vld [vmem:[%s2 + $0x54] sm:$0xf]
    %v97 = vld [vmem:[%s2 + $0x58] sm:$0xf]
    %v98 = vld [vmem:[%s2 + $0x5c] sm:$0xf]
    %v99 = vld [vmem:[%s2 + $0x60] sm:$0xf]
    %v100 = vld [vmem:[%s2 + $0x64] sm:$0xf]
    %v101 = vld [vmem:[%s2 + $0x68] sm:$0xf]
    %v102 = vld [vmem:[%s2 + $0x6c] sm:$0xf]
    %v103 = vld [vmem:[%s2 + $0x70] sm:$0xf]
    %v104 = vld [vmem:[%s2 + $0x74] sm:$0xf]
    %v105 = vld [vmem:[%s2 + $0x78] sm:$0xf]
    %v106 = vld [vmem:[%s2 + $0x7c] sm:$0xf]
    %v107 = vlaneseq
    %v108 = vshrl.u32 %v107, 7
    %v109 = vsub.s32 0, %v108
    %v110 = vrot.slane %v71, %v109
    %v112 = vunpack.c.l.b16 %v74
    %v113 = vunpack.c.h.b16 %v74
    %v114 = vpack.c.b16 %v112, %v112
    %v115 = vpack.c.b16 %v113, %v113
    %v150 = vunpack.c.l.b16 %v75
    %v151 = vunpack.c.l.b16 %v76
    %v152 = vunpack.c.l.b16 %v77
    %v153 = vunpack.c.l.b16 %v78
    %v154 = vunpack.c.l.b16 %v79
    %v155 = vunpack.c.l.b16 %v80
    %v156 = vunpack.c.l.b16 %v81
    %v157 = vunpack.c.l.b16 %v82
    %v158 = vunpack.c.l.b16 %v83
    %v159 = vunpack.c.l.b16 %v84
    %v160 = vunpack.c.l.b16 %v85
    %v161 = vunpack.c.l.b16 %v86
    %v162 = vunpack.c.l.b16 %v87
    %v163 = vunpack.c.l.b16 %v88
    %v164 = vunpack.c.l.b16 %v89
    %v165 = vunpack.c.l.b16 %v90
    %v166 = vunpack.c.l.b16 %v91
    %v167 = vunpack.c.l.b16 %v92
    %v168 = vunpack.c.l.b16 %v93
    %v169 = vunpack.c.l.b16 %v94
    %v170 = vunpack.c.l.b16 %v95
    %v171 = vunpack.c.l.b16 %v96
    %v172 = vunpack.c.l.b16 %v97
    %v173 = vunpack.c.l.b16 %v98
    %v174 = vunpack.c.l.b16 %v99
    %v175 = vunpack.c.l.b16 %v100
    %v176 = vunpack.c.l.b16 %v101
    %v177 = vunpack.c.l.b16 %v102
    %v178 = vunpack.c.l.b16 %v103
    %v179 = vunpack.c.l.b16 %v104
    %v180 = vunpack.c.l.b16 %v105
    %v181 = vunpack.c.l.b16 %v106
    %v182 = vpack.c.b16 %v151, %v150
    %v183 = vpack.c.b16 %v153, %v152
    %v184 = vpack.c.b16 %v155, %v154
    %v185 = vpack.c.b16 %v157, %v156
    %v186 = vpack.c.b16 %v159, %v158
    %v187 = vpack.c.b16 %v161, %v160
    %v188 = vpack.c.b16 %v163, %v162
    %v189 = vpack.c.b16 %v165, %v164
    %v190 = vpack.c.b16 %v167, %v166
    %v191 = vpack.c.b16 %v169, %v168
    %v192 = vpack.c.b16 %v171, %v170
    %v193 = vpack.c.b16 %v173, %v172
    %v194 = vpack.c.b16 %v175, %v174
    %v195 = vpack.c.b16 %v177, %v176
    %v196 = vpack.c.b16 %v179, %v178
    %v197 = vpack.c.b16 %v181, %v180
    %214 = vmatprep.subr.bf16.mxu0 0
    %215 = vmatpush1.bf16.msra.mxu0 %v189
    %216 = vmatprep.subr.bf16.mxu0 0
    %217 = vmatpush1.bf16.msra.mxu0 %v188
    %218 = vmatprep.subr.bf16.mxu0 0
    %219 = vmatpush1.bf16.msra.mxu0 %v187
    %220 = vmatprep.subr.bf16.mxu0 0
    %221 = vmatpush1.bf16.msra.mxu0 %v186
    %222 = vmatprep.subr.bf16.mxu0 0
    %223 = vmatpush1.bf16.msra.mxu0 %v185
    %224 = vmatprep.subr.bf16.mxu0 0
    %225 = vmatpush1.bf16.msra.mxu0 %v184
    %226 = vmatprep.subr.bf16.mxu0 0
    %227 = vmatpush1.bf16.msra.mxu0 %v183
    %228 = vmatprep.subr.bf16.mxu0 0
    %229 = vmatpush1.bf16.msra.mxu0 %v182
    %230 = vmatprep.subr.bf16.mxu0 0
    %231 = vmatpush2.bf16.msra.mxu0 %v197
    %232 = vmatprep.subr.bf16.mxu0 0
    %233 = vmatpush2.bf16.msra.mxu0 %v196
    %234 = vmatprep.subr.bf16.mxu0 0
    %235 = vmatpush2.bf16.msra.mxu0 %v195
    %236 = vmatprep.subr.bf16.mxu0 0
    %237 = vmatpush2.bf16.msra.mxu0 %v194
    %238 = vmatprep.subr.bf16.mxu0 0
    %239 = vmatpush2.bf16.msra.mxu0 %v193
    %240 = vmatprep.subr.bf16.mxu0 0
    %241 = vmatpush2.bf16.msra.mxu0 %v192
    %242 = vmatprep.subr.bf16.mxu0 0
    %243 = vmatpush2.bf16.msra.mxu0 %v191
    %244 = vmatprep.subr.bf16.mxu0 0
    %245 = vmatpush2.bf16.msra.mxu0 %v190
    %246 = vmatprep.mubr.bf16.mxu0 %v115
    %247 = vmatmul.mubr.bf16.gmra.mxu0 %v114
    %v248 = vpop.f32.mrf.mxu0
    %v249 = vadd.f32 %v110, %v248
    %v250 = vpop.f32.mrf.mxu0
    %v251 = vpop.f32.mrf.mxu0
    %v252 = vpop.f32.mrf.mxu0
    %253 = vdwg.mxu0
    %v254 = vrot.slane %v249, 4
    %v255 = vadd.f32 %v249, %v254
    %v256 = vrot.slane %v255, 2
    %v257 = vadd.f32 %v255, %v256
    %v258 = vrot.slane %v257, 1
    %v259 = vadd.f32 %v257, %v258
    %v260 = vrcp.pop 8.0
    %v261 = vmul.f32 %v259, %v260
    %v262 = vsub.f32 %v249, %v261
    %v263 = vmul.f32 %v262, %v262
    %v264 = vrot.slane %v263, 4
    %v265 = vadd.f32 %v263, %v264
    %v266 = vrot.slane %v265, 2
    %v267 = vadd.f32 %v265, %v266
    %v268 = vrot.slane %v267, 1
    %v269 = vadd.f32 %v267, %v268
    %v270 = vmul.f32 %v269, %v260
    %v271 = vadd.f32 %v270, 1e-05
    %v272 = vrsqrt.pop %v271
    %v273 = vmul.f32 %v262, %v272
    %v274 = vlaneseq
    %v275 = vshrl.u32 %v274, 7
    %v276 = vsub.s32 1, %v275
    %v277 = vrot.slane %v71, %v276
    %v278 = vmul.f32 %v273, %v277
    %v279 = vlaneseq
    %v280 = vshrl.u32 %v279, 7
    %v281 = vsub.s32 2, %v280
    %v282 = vrot.slane %v71, %v281
    %v283 = vadd.f32 %v278, %v282
    %v284 = vmax.f32 %v283, 0.0
    %v285 = vld [vmem:[%s1] sm:$0xf]
    %v286 = vld [vmem:[#allocation2] sm:$0xf]
    %v287 = vld [vmem:[#allocation2 + $0x4] sm:$0xf]
    %v288 = vld [vmem:[#allocation2 + $0x8] sm:$0xf]
    %v289 = vld [vmem:[#allocation2 + $0xc] sm:$0xf]
    %v290 = vld [vmem:[#allocation2 + $0x10] sm:$0xf]
    %v291 = vld [vmem:[#allocation2 + $0x14] sm:$0xf]
    %v292 = vld [vmem:[#allocation2 + $0x18] sm:$0xf]
    %v293 = vld [vmem:[#allocation2 + $0x1c] sm:$0xf]
    %v294 = vld [vmem:[#allocation2 + $0x20] sm:$0xf]
    %v295 = vld [vmem:[#allocation2 + $0x24] sm:$0xf]
    %v296 = vld [vmem:[#allocation2 + $0x28] sm:$0xf]
    %v297 = vld [vmem:[#allocation2 + $0x2c] sm:$0xf]
    %v298 = vld [vmem:[#allocation2 + $0x30] sm:$0xf]
    %v299 = vld [vmem:[#allocation2 + $0x34] sm:$0xf]
    %v300 = vld [vmem:[#allocation2 + $0x38] sm:$0xf]
    %v301 = vld [vmem:[#allocation2 + $0x3c] sm:$0xf]
    %v302 = vlaneseq
    %v303 = vshrl.u32 %v302, 7
    %v304 = vsub.s32 3, %v303
    %v305 = vrot.slane %v71, %v304
    %v322 = vunpack.c.l.b16 %v286
    %v323 = vunpack.c.l.b16 %v287
    %v324 = vunpack.c.l.b16 %v288
    %v325 = vunpack.c.l.b16 %v289
    %v326 = vunpack.c.l.b16 %v290
    %v327 = vunpack.c.l.b16 %v291
    %v328 = vunpack.c.l.b16 %v292
    %v329 = vunpack.c.l.b16 %v293
    %v330 = vunpack.c.l.b16 %v294
    %v331 = vunpack.c.l.b16 %v295
    %v332 = vunpack.c.l.b16 %v296
    %v333 = vunpack.c.l.b16 %v297
    %v334 = vunpack.c.l.b16 %v298
    %v335 = vunpack.c.l.b16 %v299
    %v336 = vunpack.c.l.b16 %v300
    %v337 = vunpack.c.l.b16 %v301
    %v338 = vpack.c.b16 %v323, %v322
    %v339 = vpack.c.b16 %v325, %v324
    %v340 = vpack.c.b16 %v327, %v326
    %v341 = vpack.c.b16 %v329, %v328
    %v342 = vpack.c.b16 %v331, %v330
    %v343 = vpack.c.b16 %v333, %v332
    %v344 = vpack.c.b16 %v335, %v334
    %v345 = vpack.c.b16 %v337, %v336
    %354 = vmatprep.subr.bf16.mxu0 0
    %355 = vmatpush1.bf16.msra.mxu0 %v345
    %356 = vmatprep.subr.bf16.mxu0 0
    %357 = vmatpush1.bf16.msra.mxu0 %v344
    %358 = vmatprep.subr.bf16.mxu0 0
    %359 = vmatpush1.bf16.msra.mxu0 %v343
    %360 = vmatprep.subr.bf16.mxu0 0
    %361 = vmatpush1.bf16.msra.mxu0 %v342
    %362 = vmatprep.subr.bf16.mxu0 0
    %363 = vmatpush1.bf16.msra.mxu0 %v341
    %364 = vmatprep.subr.bf16.mxu0 0
    %365 = vmatpush1.bf16.msra.mxu0 %v340
    %366 = vmatprep.subr.bf16.mxu0 0
    %367 = vmatpush1.bf16.msra.mxu0 %v339
    %368 = vmatprep.subr.bf16.mxu0 0
    %369 = vmatpush1.bf16.msra.mxu0 %v338
    %370 = vmatprep.subr.bf16.mxu0 0
    %371 = vmatpush2.bf16.msra.mxu0 0
    %372 = vmatprep.subr.bf16.mxu0 0
    %373 = vmatpush2.bf16.msra.mxu0 0
    %374 = vmatprep.subr.bf16.mxu0 0
    %375 = vmatpush2.bf16.msra.mxu0 0
    %376 = vmatprep.subr.bf16.mxu0 0
    %377 = vmatpush2.bf16.msra.mxu0 0
    %378 = vmatprep.subr.bf16.mxu0 0
    %379 = vmatpush2.bf16.msra.mxu0 0
    %380 = vmatprep.subr.bf16.mxu0 0
    %381 = vmatpush2.bf16.msra.mxu0 0
    %382 = vmatprep.subr.bf16.mxu0 0
    %383 = vmatpush2.bf16.msra.mxu0 0
    %384 = vmatprep.subr.bf16.mxu0 0
    %385 = vmatpush2.bf16.msra.mxu0 0
    %386 = vmatprep.mubr.bf16.mxu0 0
    %387 = vmatmul.mubr.bf16.gmra.mxu0 %v285
    %v388 = vpop.f32.mrf.mxu0
    %v389 = vadd.f32 %v305, %v388
    %v390 = vpop.f32.mrf.mxu0
    %v391 = vpop.f32.mrf.mxu0
    %v392 = vpop.f32.mrf.mxu0
    %393 = vdwg.mxu0
    %v394 = vrot.slane %v389, 4
    %v395 = vadd.f32 %v389, %v394
    %v396 = vrot.slane %v395, 2
    %v397 = vadd.f32 %v395, %v396
    %v398 = vrot.slane %v397, 1
    %v399 = vadd.f32 %v397, %v398
    %v400 = vmul.f32 %v399, %v260
    %v401 = vsub.f32 %v389, %v400
    %v402 = vmul.f32 %v401, %v401
    %v403 = vrot.slane %v402, 4
    %v404 = vadd.f32 %v402, %v403
    %v405 = vrot.slane %v404, 2
    %v406 = vadd.f32 %v404, %v405
    %v407 = vrot.slane %v406, 1
    %v408 = vadd.f32 %v406, %v407
    %v409 = vmul.f32 %v408, %v260
    %v410 = vadd.f32 %v409, 1e-05
    %v411 = vrsqrt.pop %v410
    %v412 = vmul.f32 %v401, %v411
    %v413 = vlaneseq
    %v414 = vshrl.u32 %v413, 7
    %v415 = vsub.s32 4, %v414
    %v416 = vrot.slane %v71, %v415
    %v417 = vmul.f32 %v412, %v416
    %v418 = vlaneseq
    %v419 = vshrl.u32 %v418, 7
    %v420 = vsub.s32 5, %v419
    %v421 = vrot.slane %v71, %v420
    %v422 = vadd.f32 %v417, %v421
    %v423 = vmax.f32 %v422, 0.0
    %v424 = vpack.c.bf16 %v423, %v284
    %v425 = vld [vmem:[#allocation4] sm:$0xf]
    %v426 = vld [vmem:[#allocation4 + $0x4] sm:$0xf]
    %v427 = vld [vmem:[#allocation4 + $0x8] sm:$0xf]
    %v428 = vld [vmem:[#allocation4 + $0xc] sm:$0xf]
    %v429 = vld [vmem:[#allocation4 + $0x10] sm:$0xf]
    %v430 = vld [vmem:[#allocation4 + $0x14] sm:$0xf]
    %v431 = vld [vmem:[#allocation4 + $0x18] sm:$0xf]
    %v432 = vld [vmem:[#allocation4 + $0x1c] sm:$0xf]
    %v433 = vld [vmem:[#allocation4 + $0x20] sm:$0xf]
    %v434 = vld [vmem:[#allocation4 + $0x24] sm:$0xf]
    %v435 = vld [vmem:[#allocation4 + $0x28] sm:$0xf]
    %v436 = vld [vmem:[#allocation4 + $0x2c] sm:$0xf]
    %v437 = vld [vmem:[#allocation4 + $0x30] sm:$0xf]
    %v438 = vld [vmem:[#allocation4 + $0x34] sm:$0xf]
    %v439 = vld [vmem:[#allocation4 + $0x38] sm:$0xf]
    %v440 = vld [vmem:[#allocation4 + $0x3c] sm:$0xf]
    %v441 = vlaneseq
    %v442 = vshrl.u32 %v441, 7
    %v443 = vsub.s32 6, %v442
    %v444 = vrot.slane %v71, %v443
    %v461 = vunpack.c.l.b16 %v425
    %v462 = vunpack.c.l.b16 %v426
    %v463 = vunpack.c.l.b16 %v427
    %v464 = vunpack.c.l.b16 %v428
    %v465 = vunpack.c.l.b16 %v429
    %v466 = vunpack.c.l.b16 %v430
    %v467 = vunpack.c.l.b16 %v431
    %v468 = vunpack.c.l.b16 %v432
    %v469 = vunpack.c.l.b16 %v433
    %v470 = vunpack.c.l.b16 %v434
    %v471 = vunpack.c.l.b16 %v435
    %v472 = vunpack.c.l.b16 %v436
    %v473 = vunpack.c.l.b16 %v437
    %v474 = vunpack.c.l.b16 %v438
    %v475 = vunpack.c.l.b16 %v439
    %v476 = vunpack.c.l.b16 %v440
    %v477 = vpack.c.b16 %v462, %v461
    %v478 = vpack.c.b16 %v464, %v463
    %v479 = vpack.c.b16 %v466, %v465
    %v480 = vpack.c.b16 %v468, %v467
    %v481 = vpack.c.b16 %v470, %v469
    %v482 = vpack.c.b16 %v472, %v471
    %v483 = vpack.c.b16 %v474, %v473
    %v484 = vpack.c.b16 %v476, %v475
    %493 = vmatprep.subr.bf16.mxu0 0
    %494 = vmatpush1.bf16.msra.mxu0 %v484
    %495 = vmatprep.subr.bf16.mxu0 0
    %496 = vmatpush1.bf16.msra.mxu0 %v483
    %497 = vmatprep.subr.bf16.mxu0 0
    %498 = vmatpush1.bf16.msra.mxu0 %v482
    %499 = vmatprep.subr.bf16.mxu0 0
    %500 = vmatpush1.bf16.msra.mxu0 %v481
    %501 = vmatprep.subr.bf16.mxu0 0
    %502 = vmatpush1.bf16.msra.mxu0 %v480
    %503 = vmatprep.subr.bf16.mxu0 0
    %504 = vmatpush1.bf16.msra.mxu0 %v479
    %505 = vmatprep.subr.bf16.mxu0 0
    %506 = vmatpush1.bf16.msra.mxu0 %v478
    %507 = vmatprep.subr.bf16.mxu0 0
    %508 = vmatpush1.bf16.msra.mxu0 %v477
    %509 = vmatprep.subr.bf16.mxu0 0
    %510 = vmatpush2.bf16.msra.mxu0 0
    %511 = vmatprep.subr.bf16.mxu0 0
    %512 = vmatpush2.bf16.msra.mxu0 0
    %513 = vmatprep.subr.bf16.mxu0 0
    %514 = vmatpush2.bf16.msra.mxu0 0
    %515 = vmatprep.subr.bf16.mxu0 0
    %516 = vmatpush2.bf16.msra.mxu0 0
    %517 = vmatprep.subr.bf16.mxu0 0
    %518 = vmatpush2.bf16.msra.mxu0 0
    %519 = vmatprep.subr.bf16.mxu0 0
    %520 = vmatpush2.bf16.msra.mxu0 0
    %521 = vmatprep.subr.bf16.mxu0 0
    %522 = vmatpush2.bf16.msra.mxu0 0
    %523 = vmatprep.subr.bf16.mxu0 0
    %524 = vmatpush2.bf16.msra.mxu0 0
    %525 = vmatprep.mubr.bf16.mxu0 0
    %526 = vmatmul.mubr.bf16.gmra.mxu0 %v424
    %v527 = vpop.f32.mrf.mxu0
    %v528 = vadd.f32 %v444, %v527
    %v529 = vpop.f32.mrf.mxu0
    %v530 = vpop.f32.mrf.mxu0
    %v531 = vadd.f32 %v444, %v530
    %v532 = vpop.f32.mrf.mxu0
    %533 = vdwg.mxu0
    %v534 = vrot.slane %v528, 4
    %v535 = vadd.f32 %v528, %v534
    %v536 = vrot.slane %v535, 2
    %v537 = vadd.f32 %v535, %v536
    %v538 = vrot.slane %v537, 1
    %v539 = vadd.f32 %v537, %v538
    %v540 = vmul.f32 %v539, %v260
    %v541 = vsub.f32 %v528, %v540
    %v542 = vmul.f32 %v541, %v541
    %v543 = vrot.slane %v542, 4
    %v544 = vadd.f32 %v542, %v543
    %v545 = vrot.slane %v544, 2
    %v546 = vadd.f32 %v544, %v545
    %v547 = vrot.slane %v546, 1
    %v548 = vadd.f32 %v546, %v547
    %v549 = vmul.f32 %v548, %v260
    %v550 = vadd.f32 %v549, 1e-05
    %v551 = vrsqrt.pop %v550
    %v552 = vmul.f32 %v541, %v551
    %v553 = vlaneseq
    %v554 = vshrl.u32 %v553, 7
    %v555 = vsub.s32 7, %v554
    %v556 = vrot.slane %v71, %v555
    %v557 = vmul.f32 %v552, %v556
    %v558 = vlaneseq
    %v559 = vshrl.u32 %v558, 7
    %v560 = vsub.s32 0, %v559
    %v561 = vrot.slane %v72, %v560
    %v562 = vadd.f32 %v557, %v561
    %v563 = vmax.f32 %v562, 0.0
    %v564 = vrot.slane %v531, 4
    %v565 = vadd.f32 %v531, %v564
    %v566 = vrot.slane %v565, 2
    %v567 = vadd.f32 %v565, %v566
    %v568 = vrot.slane %v567, 1
    %v569 = vadd.f32 %v567, %v568
    %v570 = vmul.f32 %v569, %v260
    %v571 = vsub.f32 %v531, %v570
    %v572 = vmul.f32 %v571, %v571
    %v573 = vrot.slane %v572, 4
    %v574 = vadd.f32 %v572, %v573
    %v575 = vrot.slane %v574, 2
    %v576 = vadd.f32 %v574, %v575
    %v577 = vrot.slane %v576, 1
    %v578 = vadd.f32 %v576, %v577
    %v579 = vmul.f32 %v578, %v260
    %v580 = vadd.f32 %v579, 1e-05
    %v581 = vrsqrt.pop %v580
    %v582 = vmul.f32 %v571, %v581
    %v583 = vmul.f32 %v582, %v556
    %v584 = vadd.f32 %v583, %v561
    %v585 = vmax.f32 %v584, 0.0
    %v586 = vpack.c.bf16 %v585, %v563
    %v587 = vld [vmem:[%s5] sm:$0xf]
    %v588 = vld [vmem:[%s5 + $0x4] sm:$0xf]
    %v589 = vld [vmem:[%s5 + $0x8] sm:$0xf]
    %v590 = vld [vmem:[%s5 + $0xc] sm:$0xf]
    %v591 = vld [vmem:[%s5 + $0x10] sm:$0xf]
    %v592 = vld [vmem:[%s5 + $0x14] sm:$0xf]
    %v593 = vld [vmem:[%s5 + $0x18] sm:$0xf]
    %v594 = vld [vmem:[%s5 + $0x1c] sm:$0xf]
    %v595 = vld [vmem:[%s5 + $0x20] sm:$0xf]
    %v596 = vld [vmem:[%s5 + $0x24] sm:$0xf]
    %v597 = vld [vmem:[%s5 + $0x28] sm:$0xf]
    %v598 = vld [vmem:[%s5 + $0x2c] sm:$0xf]
    %v599 = vld [vmem:[%s5 + $0x30] sm:$0xf]
    %v600 = vld [vmem:[%s5 + $0x34] sm:$0xf]
    %v601 = vld [vmem:[%s5 + $0x38] sm:$0xf]
    %v602 = vld [vmem:[%s5 + $0x3c] sm:$0xf]
    %v603 = vlaneseq
    %v604 = vshrl.u32 %v603, 7
    %v605 = vsub.s32 0, %v604
    %v606 = vrot.slane %v73, %v605
    %v623 = vunpack.c.l.b16 %v587
    %v624 = vunpack.c.l.b16 %v588
    %v625 = vunpack.c.l.b16 %v589
    %v626 = vunpack.c.l.b16 %v590
    %v627 = vunpack.c.l.b16 %v591
    %v628 = vunpack.c.l.b16 %v592
    %v629 = vunpack.c.l.b16 %v593
    %v630 = vunpack.c.l.b16 %v594
    %v631 = vunpack.c.l.b16 %v595
    %v632 = vunpack.c.l.b16 %v596
    %v633 = vunpack.c.l.b16 %v597
    %v634 = vunpack.c.l.b16 %v598
    %v635 = vunpack.c.l.b16 %v599
    %v636 = vunpack.c.l.b16 %v600
    %v637 = vunpack.c.l.b16 %v601
    %v638 = vunpack.c.l.b16 %v602
    %v639 = vpack.c.b16 %v624, %v623
    %v640 = vpack.c.b16 %v626, %v625
    %v641 = vpack.c.b16 %v628, %v627
    %v642 = vpack.c.b16 %v630, %v629
    %v643 = vpack.c.b16 %v632, %v631
    %v644 = vpack.c.b16 %v634, %v633
    %v645 = vpack.c.b16 %v636, %v635
    %v646 = vpack.c.b16 %v638, %v637
    %655 = vmatprep.subr.bf16.mxu0 0
    %656 = vmatpush1.bf16.msra.mxu0 %v646
    %657 = vmatprep.subr.bf16.mxu0 0
    %658 = vmatpush1.bf16.msra.mxu0 %v645
    %659 = vmatprep.subr.bf16.mxu0 0
    %660 = vmatpush1.bf16.msra.mxu0 %v644
    %661 = vmatprep.subr.bf16.mxu0 0
    %662 = vmatpush1.bf16.msra.mxu0 %v643
    %663 = vmatprep.subr.bf16.mxu0 0
    %664 = vmatpush1.bf16.msra.mxu0 %v642
    %665 = vmatprep.subr.bf16.mxu0 0
    %666 = vmatpush1.bf16.msra.mxu0 %v641
    %667 = vmatprep.subr.bf16.mxu0 0
    %668 = vmatpush1.bf16.msra.mxu0 %v640
    %669 = vmatprep.subr.bf16.mxu0 0
    %670 = vmatpush1.bf16.msra.mxu0 %v639
    %671 = vmatprep.subr.bf16.mxu0 0
    %672 = vmatpush2.bf16.msra.mxu0 0
    %673 = vmatprep.subr.bf16.mxu0 0
    %674 = vmatpush2.bf16.msra.mxu0 0
    %675 = vmatprep.subr.bf16.mxu0 0
    %676 = vmatpush2.bf16.msra.mxu0 0
    %677 = vmatprep.subr.bf16.mxu0 0
    %678 = vmatpush2.bf16.msra.mxu0 0
    %679 = vmatprep.subr.bf16.mxu0 0
    %680 = vmatpush2.bf16.msra.mxu0 0
    %681 = vmatprep.subr.bf16.mxu0 0
    %682 = vmatpush2.bf16.msra.mxu0 0
    %683 = vmatprep.subr.bf16.mxu0 0
    %684 = vmatpush2.bf16.msra.mxu0 0
    %685 = vmatprep.subr.bf16.mxu0 0
    %686 = vmatpush2.bf16.msra.mxu0 0
    %687 = vmatprep.mubr.bf16.mxu0 0
    %688 = vmatmul.mubr.bf16.gmra.mxu0 %v586
    %v689 = vpop.f32.mrf.mxu0
    %v690 = vadd.f32 %v606, %v689
    %v691 = vpop.f32.mrf.mxu0
    %v692 = vpop.f32.mrf.mxu0
    %v693 = vadd.f32 %v606, %v692
    %v694 = vpop.f32.mrf.mxu0
    %695 = vdwg.mxu0
    %vm696 = vcmask 523264
    %v697 = vsel %vm696, %v690, 0.0
    %v698 = vrot.slane %v697, 4
    %v699 = vadd.f32 %v697, %v698
    %v700 = vrot.slane %v699, 2
    %v701 = vadd.f32 %v699, %v700
    %v702 = vrot.slane %v701, 1
    %v703 = vadd.f32 %v701, %v702
    %v704 = vmul.f32 %v703, %v260
    %v705 = vsub.f32 %v690, %v704
    %v706 = vmul.f32 %v705, %v705
    %v707 = vsel %vm696, %v706, 0.0
    %v708 = vrot.slane %v707, 4
    %v709 = vadd.f32 %v707, %v708
    %v710 = vrot.slane %v709, 2
    %v711 = vadd.f32 %v709, %v710
    %v712 = vrot.slane %v711, 1
    %v713 = vadd.f32 %v711, %v712
    %v714 = vmul.f32 %v713, %v260
    %v715 = vadd.f32 %v714, 1e-05
    %v716 = vrsqrt.pop %v715
    %v717 = vmul.f32 %v705, %v716
    %v718 = vlaneseq
    %v719 = vshrl.u32 %v718, 7
    %v720 = vsub.s32 1, %v719
    %v721 = vrot.slane %v73, %v720
    %v722 = vmul.f32 %v717, %v721
    %v723 = vlaneseq
    %v724 = vshrl.u32 %v723, 7
    %v725 = vsub.s32 2, %v724
    %v726 = vrot.slane %v73, %v725
    %v727 = vadd.f32 %v722, %v726
    %v728 = vmax.f32 %v727, 0.0
    %v729 = vsel %vm696, %v693, 0.0
    %v730 = vrot.slane %v729, 4
    %v731 = vadd.f32 %v729, %v730
    %v732 = vrot.slane %v731, 2
    %v733 = vadd.f32 %v731, %v732
    %v734 = vrot.slane %v733, 1
    %v735 = vadd.f32 %v733, %v734
    %v736 = vmul.f32 %v735, %v260
    %v737 = vsub.f32 %v693, %v736
    %v738 = vmul.f32 %v737, %v737
    %v739 = vsel %vm696, %v738, 0.0
    %v740 = vrot.slane %v739, 4
    %v741 = vadd.f32 %v739, %v740
    %v742 = vrot.slane %v741, 2
    %v743 = vadd.f32 %v741, %v742
    %v744 = vrot.slane %v743, 1
    %v745 = vadd.f32 %v743, %v744
    %v746 = vmul.f32 %v745, %v260
    %v747 = vadd.f32 %v746, 1e-05
    %v748 = vrsqrt.pop %v747
    %v749 = vmul.f32 %v737, %v748
    %v750 = vmul.f32 %v749, %v721
    %v751 = vadd.f32 %v750, %v726
    %v752 = vmax.f32 %v751, 0.0
    %754 = vrot.lane.b32.xlu0 %v752, 64
    %v755 = vpop.permute.xlu0 %754
    %v757 = vsel %vm696, %v728, %v755
    %758 = vst [vmem:[%s8] sm:$0xff] %v757
    // Predicated region
    $region46: #{siamese_forward.1} parent=1 // pred_check
      _
    $region47: #{siamese_forward.1} parent=1 // pred_check_branch
      %760 = sbr.rel (0) target = $region49
    $region48: #{siamese_forward.1} parent=1 // pred_region
      _
    $region49: #{siamese_forward.1} parent=1 // pred_fallthru
      _
    // Predicated region
    $region50: #{siamese_forward.1} parent=1 // pred_check
      _
    $region51: #{siamese_forward.1} parent=1 // pred_check_branch
      %762 = sbr.rel (0) target = $region53
    $region52: #{siamese_forward.1} parent=1 // pred_region
      _
    $region53: #{siamese_forward.1} parent=1 // pred_fallthru
      _
    %763 = vsyncpa [#allocation3], 1
    %764 = vsyncpa [#allocation5], 1

</llo_original>
